<compile_context>
chip_gen: v7x
topology: tpu7x:2x2x1
jax: 0.10.0
libtpu: 0.0.40
codegen_flags: <defaults>
</compile_context>

<pallas_src>
import functools

import jax
import jax.numpy as jnp
from jax import lax
from jax.experimental import pallas as pl
from jax.experimental.pallas import tpu as pltpu


def _cdiv(a, b):
    return -(-a // b)


def _round_up(x, m):
    return (x + m - 1) // m * m


def _kd_loss_kernel(x_ref, t_ref, out_ref, acc_ref, *,
                    inv_temp, batch, block_rows, tiles_per_core):
    i = pl.program_id(1)

    @pl.when(i == 0)
    def _():
        acc_ref[...] = jnp.zeros_like(acc_ref)

    # (TB, C) tile promoted to f32; temperature applied as a multiply.
    x = x_ref[...].astype(jnp.float32) * inv_temp
    y = t_ref[...].astype(jnp.float32) * inv_temp

    # log_softmax(x) pieces (class axis = 1).
    x_shift = x - jnp.max(x, axis=1, keepdims=True)
    x_lse = jnp.log(jnp.sum(jnp.exp(x_shift), axis=1, keepdims=True))

    # softmax(y) pieces; q itself is never materialized.
    y_shift = y - jnp.max(y, axis=1, keepdims=True)
    ey = jnp.exp(y_shift)
    y_sum = jnp.sum(ey, axis=1, keepdims=True)

    # Per-row KL (uses sum_j q_j == 1):
    #   sum_j q_j (log q_j - log p_j)
    #     = [sum_j ey_j (y_shift_j - x_shift_j)] / y_sum + (x_lse - log y_sum)
    row_num = jnp.sum(ey * (y_shift - x_shift), axis=1, keepdims=True)
    row_kl = (row_num * pl.reciprocal(y_sum, approx=False)   # exact: 1e-5 tol
              + (x_lse - jnp.log(y_sum)))

    # Mask rows past the true batch (ragged last tile and clamped duplicate
    # tiles on an out-of-work grid row contribute exactly zero).
    tile = pl.program_id(0) * tiles_per_core + i
    rows = tile * block_rows + lax.broadcasted_iota(jnp.int32, row_kl.shape, 0)
    row_kl = jnp.where(rows < batch, row_kl, 0.0)

    acc_ref[...] += jnp.sum(row_kl, axis=(0, 1), keepdims=True)

    @pl.when(i == pl.num_programs(1) - 1)
    def _():
        out_ref[...] = jnp.broadcast_to(acc_ref[...], out_ref.shape)


def _vmem_limit_bytes():
    """Chip-aware scoped-VMEM limit (v5e/v6e: 128 MiB phys, v7x: 64 MiB/TC)."""
    try:
        cap = int(pltpu.get_tpu_info().vmem_capacity_bytes)
    except Exception:
        cap = 64 * 1024 * 1024            # most conservative (v7x per-TC)
    return max(32 * 1024 * 1024, min(cap - 16 * 1024 * 1024, 100 * 1024 * 1024))


def kd_loss(inputs, targets, temp_factor, block_rows=None):
    """Pallas implementation of KDLoss(temp_factor)(inputs, targets).

    inputs/targets: (B, C) logits.  Hand in bf16 logits if the model already
    produces them (halves HBM traffic); math runs in f32 per tile regardless.
    """
    assert inputs.shape == targets.shape and inputs.ndim == 2
    B, C = inputs.shape
    itemsize = jnp.dtype(inputs.dtype).itemsize
    vmem_limit = _vmem_limit_bytes()

    if block_rows is None:
        # VMEM per tile row: 2 inputs x 2 pipeline buffers x itemsize plus
        # ~5 live (TB, C) f32 temporaries.  Size the tile against ~75% of the
        # scoped limit; big tiles amortize the ~0.35 us/step grid overhead.
        per_row = C * (2 * 2 * itemsize + 5 * 4)
        block_rows = (3 * vmem_limit // 4) // max(per_row, 1)
        # TODO(synk): for C so large that even 8 rows of f32 temporaries blow
        # the budget, add class-dimension tiling with an online logsumexp.
    TB = int(block_rows)
    TB = max(8, min(TB, 4096))
    TB = max(8, (TB // 8) * 8)            # sublane-aligned
    TB = min(TB, _round_up(B, 8))

    num_tiles = _cdiv(B, TB)
    # Leading "parallel" axis: v7x has 2 TensorCores/chip, each accumulates its
    # own partial; on 1-TC chips the second grid row is a short sequential tail.
    num_cores = 2 if num_tiles > 1 else 1
    tiles_per_core = _cdiv(num_tiles, num_cores)

    def tile_index(c, i):
        # Clamp so out-of-work steps re-read a valid tile; those rows are
        # masked to zero inside the kernel.
        return (jnp.minimum(c * tiles_per_core + i, num_tiles - 1), 0)

    kernel = functools.partial(
        _kd_loss_kernel,
        inv_temp=1.0 / float(temp_factor),
        batch=B,
        block_rows=TB,
        tiles_per_core=tiles_per_core,
    )

    out = pl.pallas_call(
        kernel,
        out_shape=jax.ShapeDtypeStruct((num_cores, 8, 128), jnp.float32),
        grid=(num_cores, tiles_per_core),
        in_specs=[
            pl.BlockSpec((TB, C), tile_index),
            pl.BlockSpec((TB, C), tile_index),
        ],
        out_specs=pl.BlockSpec((1, 8, 128), lambda c, i: (c, 0, 0)),
        scratch_shapes=[pltpu.VMEM((1, 1), jnp.float32)],
        compiler_params=pltpu.CompilerParams(
            dimension_semantics=("parallel", "arbitrary"),
            vmem_limit_bytes=vmem_limit,
        ),
        # TODO(synk): with large tiles, sweep pipeline_mode=pl.Buffered(3) on
        # the two input specs (review expects <= a few % either way).
    )(inputs, targets)

    scale = float(temp_factor) ** 2 / float(B)
    return jnp.sum(out[:, 0, 0]) * scale


def kd_loss_ref(inputs, targets, temp_factor):
    """Plain-JAX reference mirroring the PyTorch module."""
    T = float(temp_factor)
    log_p = jax.nn.log_softmax(inputs.astype(jnp.float32) / T, axis=1)
    q = jax.nn.softmax(targets.astype(jnp.float32) / T, axis=1)
    kl = jnp.sum(q * (jnp.log(q) - log_p))
    return kl * T ** 2 / inputs.shape[0]


if __name__ == "__main__":
    temp_factor = 4.0
    B, C = 20, 128  # batch not a multiple of the 8-row tile -> exercises mask

    key = jax.random.PRNGKey(0)
    k1, k2 = jax.random.split(key)
    student_logits = jax.random.normal(k1, (B, C), dtype=jnp.float32)
    teacher_logits = jax.random.normal(k2, (B, C), dtype=jnp.float32)

    expected = kd_loss_ref(student_logits, teacher_logits, temp_factor)

    # Small explicit tile -> 3 batch tiles over a (2, 2) grid, exercising the
    # init/accumulate/finalize phases, the ragged-row mask, and the clamped
    # duplicate tile on the second grid row.
    loss = kd_loss(student_logits, teacher_logits, temp_factor, block_rows=8)
    loss = jax.block_until_ready(loss)
    assert jnp.allclose(loss, expected, rtol=1e-5, atol=1e-5), (loss, expected)

    # Default (VMEM-budgeted) tile path: single tile, single grid row.
    loss2 = kd_loss(student_logits, teacher_logits, temp_factor)
    loss2 = jax.block_until_ready(loss2)
    assert jnp.allclose(loss2, expected, rtol=1e-5, atol=1e-5), (loss2, expected)

    print("KERNEL_OK")
</pallas_src>

<mosaic_0001>
module attributes {stable_mosaic.version = 11 : i64} {
  func.func @_kd_loss_kernel(%arg0: i32, %arg1: i32, %arg2: memref<8x128xf32, #tpu.memory_space<vmem>>, %arg3: memref<8x128xf32, #tpu.memory_space<vmem>>, %arg4: memref<1x8x128xf32, #tpu.memory_space<vmem>>, %arg5: memref<1x1xf32, #tpu.memory_space<vmem>>) attributes {dimension_semantics = [#tpu.dimension_semantics<parallel>, #tpu.dimension_semantics<arbitrary>], iteration_bounds = array<i64: 2, 2>, scalar_prefetch = 0 : i64, scratch_operands = 1 : i64, tpu.core_type = #tpu.core_type<tc>, window_params = [{transform_indices = @transform_0, window_bounds = array<i64: 8, 128>}, {transform_indices = @transform_1, window_bounds = array<i64: 8, 128>}, {transform_indices = @transform_2, window_bounds = array<i64: 1, 8, 128>}]} {
    %c0_i32 = arith.constant 0 : i32
    %0 = arith.cmpi eq, %arg1, %c0_i32 : i32
    %1 = arith.extui %0 : i1 to i32
    %c0_i32_0 = arith.constant 0 : i32
    %2 = arith.cmpi ne, %1, %c0_i32_0 : i32
    scf.if %2 {
      %cst_17 = arith.constant 0.000000e+00 : f32
      %54 = vector.broadcast %cst_17 : f32 to vector<1x1xf32>
      %c0_18 = arith.constant 0 : index
      %c0_19 = arith.constant 0 : index
      %55 = vector.load %arg5[%c0_18, %c0_19] : memref<1x1xf32, #tpu.memory_space<vmem>>, vector<1x1xf32>
      tpu.vector_store %arg5[%c0_18, %c0_19], %54 {strides = array<i32>} : memref<1x1xf32, #tpu.memory_space<vmem>>, vector<1x1xf32>,
    } else {
    }
    %c0 = arith.constant 0 : index
    %c0_1 = arith.constant 0 : index
    %3 = vector.load %arg2[%c0, %c0_1] : memref<8x128xf32, #tpu.memory_space<vmem>>, vector<8x128xf32>
    %cst = arith.constant 2.500000e-01 : f32
    %4 = vector.broadcast %cst : f32 to vector<8x128xf32>
    %5 = arith.mulf %3, %4 : vector<8x128xf32>
    %c0_2 = arith.constant 0 : index
    %c0_3 = arith.constant 0 : index
    %6 = vector.load %arg3[%c0_2, %c0_3] : memref<8x128xf32, #tpu.memory_space<vmem>>, vector<8x128xf32>
    %cst_4 = arith.constant 2.500000e-01 : f32
    %7 = vector.broadcast %cst_4 : f32 to vector<8x128xf32>
    %8 = arith.mulf %6, %7 : vector<8x128xf32>
    %cst_5 = arith.constant dense<0xFF800000> : vector<8xf32>
    %9 = vector.multi_reduction <maximumf>, %5, %cst_5 [1] : vector<8x128xf32> to vector<8xf32>
    %10 = vector.shape_cast %9 : vector<8xf32> to vector<8x1xf32>
    %11 = vector.broadcast %10 : vector<8x1xf32> to vector<8x128xf32>
    %12 = arith.subf %5, %11 : vector<8x128xf32>
    %13 = math.exp %12 : vector<8x128xf32>
    %cst_6 = arith.constant dense<0.000000e+00> : vector<8xf32>
    %14 = vector.multi_reduction <add>, %13, %cst_6 [1] : vector<8x128xf32> to vector<8xf32>
    %15 = vector.shape_cast %14 : vector<8xf32> to vector<8x1xf32>
    %16 = math.log %15 : vector<8x1xf32>
    %cst_7 = arith.constant dense<0xFF800000> : vector<8xf32>
    %17 = vector.multi_reduction <maximumf>, %8, %cst_7 [1] : vector<8x128xf32> to vector<8xf32>
    %18 = vector.shape_cast %17 : vector<8xf32> to vector<8x1xf32>
    %19 = vector.broadcast %18 : vector<8x1xf32> to vector<8x128xf32>
    %20 = arith.subf %8, %19 : vector<8x128xf32>
    %21 = math.exp %20 : vector<8x128xf32>
    %cst_8 = arith.constant dense<0.000000e+00> : vector<8xf32>
    %22 = vector.multi_reduction <add>, %21, %cst_8 [1] : vector<8x128xf32> to vector<8xf32>
    %23 = vector.shape_cast %22 : vector<8xf32> to vector<8x1xf32>
    %24 = arith.subf %20, %12 : vector<8x128xf32>
    %25 = arith.mulf %21, %24 : vector<8x128xf32>
    %cst_9 = arith.constant dense<0.000000e+00> : vector<8xf32>
    %26 = vector.multi_reduction <add>, %25, %cst_9 [1] : vector<8x128xf32> to vector<8xf32>
    %27 = vector.shape_cast %26 : vector<8xf32> to vector<8x1xf32>
    %28 = tpu.reciprocal %23 : vector<8x1xf32> -> vector<8x1xf32>
    %29 = arith.mulf %27, %28 : vector<8x1xf32>
    %30 = math.log %23 : vector<8x1xf32>
    %31 = arith.subf %16, %30 : vector<8x1xf32>
    %32 = arith.addf %29, %31 : vector<8x1xf32>
    %c2_i32 = arith.constant 2 : i32
    %33 = arith.muli %arg0, %c2_i32 : i32
    %34 = arith.addi %33, %arg1 : i32
    %c8_i32 = arith.constant 8 : i32
    %35 = arith.muli %34, %c8_i32 : i32
    %36 = tpu.iota {dimensions = array<i32: 0>} : vector<8x1xi32>
    %37 = vector.broadcast %35 : i32 to vector<8x1xi32>
    %38 = arith.addi %37, %36 : vector<8x1xi32>
    %c20_i32 = arith.constant 20 : i32
    %39 = vector.broadcast %c20_i32 : i32 to vector<8x1xi32>
    %40 = arith.cmpi slt, %38, %39 : vector<8x1xi32>
    %cst_10 = arith.constant 0.000000e+00 : f32
    %41 = vector.broadcast %cst_10 : f32 to vector<8x1xf32>
    %42 = arith.select %40, %32, %41 : vector<8x1xi1>, vector<8x1xf32>
    %c0_11 = arith.constant 0 : index
    %c0_12 = arith.constant 0 : index
    %43 = vector.load %arg5[%c0_11, %c0_12] : memref<1x1xf32, #tpu.memory_space<vmem>>, vector<1x1xf32>
    %44 = vector.shape_cast %42 : vector<8x1xf32> to vector<1x8x1xf32>
    %cst_13 = arith.constant dense<0.000000e+00> : vector<1xf32>
    %45 = vector.multi_reduction <add>, %44, %cst_13 [1, 2] : vector<1x8x1xf32> to vector<1xf32>
    %46 = vector.shape_cast %45 : vector<1xf32> to vector<1x1x1xf32>
    %47 = vector.extract %46[0, 0, 0] : f32 from vector<1x1x1xf32>
    %48 = vector.broadcast %47 : f32 to vector<1x1xf32>
    %49 = arith.addf %43, %48 : vector<1x1xf32>
    %c0_14 = arith.constant 0 : index
    %c0_15 = arith.constant 0 : index
    %50 = vector.load %arg5[%c0_14, %c0_15] : memref<1x1xf32, #tpu.memory_space<vmem>>, vector<1x1xf32>
    tpu.vector_store %arg5[%c0_14, %c0_15], %49 {strides = array<i32>} : memref<1x1xf32, #tpu.memory_space<vmem>>, vector<1x1xf32>,
    %c1_i32 = arith.constant 1 : i32
    %51 = arith.cmpi eq, %arg1, %c1_i32 : i32
    %52 = arith.extui %51 : i1 to i32
    %c0_i32_16 = arith.constant 0 : i32
    %53 = arith.cmpi ne, %52, %c0_i32_16 : i32
    scf.if %53 {
      %c0_17 = arith.constant 0 : index
      %c0_18 = arith.constant 0 : index
      %54 = vector.load %arg5[%c0_17, %c0_18] : memref<1x1xf32, #tpu.memory_space<vmem>>, vector<1x1xf32>
      %55 = vector.shape_cast %54 : vector<1x1xf32> to vector<1x1x1xf32>
      %56 = vector.broadcast %55 : vector<1x1x1xf32> to vector<1x8x128xf32>
      %c0_19 = arith.constant 0 : index
      %c0_20 = arith.constant 0 : index
      %c0_21 = arith.constant 0 : index
      %57 = vector.load %arg4[%c0_19, %c0_20, %c0_21] : memref<1x8x128xf32, #tpu.memory_space<vmem>>, vector<1x8x128xf32>
      tpu.vector_store %arg4[%c0_19, %c0_20, %c0_21], %56 {strides = array<i32>} : memref<1x8x128xf32, #tpu.memory_space<vmem>>, vector<1x8x128xf32>,
    } else {
    }
    return
  }
  func.func @transform_0(%arg0: i32, %arg1: i32) -> (i32, i32) {
    %c2_i32 = arith.constant 2 : i32
    %0 = arith.muli %arg0, %c2_i32 : i32
    %1 = arith.addi %0, %arg1 : i32
    %c2_i32_0 = arith.constant 2 : i32
    %2 = arith.minsi %1, %c2_i32_0 : i32
    %c0_i32 = arith.constant 0 : i32
    %c0_i32_1 = arith.constant 0 : i32
    return %2, %c0_i32 : i32, i32
  }
  func.func @transform_1(%arg0: i32, %arg1: i32) -> (i32, i32) {
    %c2_i32 = arith.constant 2 : i32
    %0 = arith.muli %arg0, %c2_i32 : i32
    %1 = arith.addi %0, %arg1 : i32
    %c2_i32_0 = arith.constant 2 : i32
    %2 = arith.minsi %1, %c2_i32_0 : i32
    %c0_i32 = arith.constant 0 : i32
    %c0_i32_1 = arith.constant 0 : i32
    return %2, %c0_i32 : i32, i32
  }
  func.func @transform_2(%arg0: i32, %arg1: i32) -> (i32, i32, i32) {
    %c0_i32 = arith.constant 0 : i32
    %c0_i32_0 = arith.constant 0 : i32
    %c0_i32_1 = arith.constant 0 : i32
    return %arg0, %c0_i32, %c0_i32_0 : i32, i32, i32
  }
}

</mosaic_0001>

<llo_original>
// kernel: tpu_custom_call.1
$region0: #{tpu_custom_call.1}
  #allocation0 [shape = 'u32[]', space=smem, size = 0x4, offset = 0x4, fixed_abs, tag = 'smem constant byte address 0x4 - core index']
  #allocation1 [shape = 'u32[144,128]{1,0:T(1,128)}', space=vmem, size = 0x12000, scoped, tag = 'internal scratch']
  #allocation2 [shape = 'f32[1,1]{1,0:T(1,128)}', space=vmem, size = 0x200, scoped, tag = 'scratch operand']
  %s0 = inlined_call_operand.hbm [shape: f32[20,128], index: 0, kind: input, shape index: {}]
  %s1 = inlined_call_operand.hbm [shape: f32[20,128], index: 1, kind: input, shape index: {}]
  %s2 = inlined_call_operand.hbm [shape: f32[2,8,128], index: 2, kind: output, shape index: {}]
  %s3 = sld [smem:[#allocation0]]
  $region57: #{tpu_custom_call.1} parent=0
    _
  %s5 = ssub.s32 1, %s3
  %s6 = scalar_select 0, %s5, %s3
  $region1: #{tpu_custom_call.1} parent=0
    #allocation3 [shape = 'u8[8192]{0}', space=vmem, size = 0x2000, scoped, tag = 'input window, operand 0']
    #allocation4 [shape = 's32[2]{0}', space=sflag, size = 0x8, scoped, tag = 'scoped memory for tpu_custom_call.1']
    #allocation5 [shape = 's32[2]{0}', space=sflag, size = 0x8, scoped, tag = 'scoped memory for tpu_custom_call.1']
    #allocation6 [shape = 'u8[8192]{0}', space=vmem, size = 0x2000, scoped, tag = 'input window, operand 1']
    #allocation7 [shape = 's32[2]{0}', space=sflag, size = 0x8, scoped, tag = 'scoped memory for tpu_custom_call.1']
    #allocation8 [shape = 'u8[8192]{0}', space=vmem, size = 0x2000, scoped, tag = 'output window, operand 0']
    %7 = vsyncpa [#allocation4], 0
    %s8 = scalar_lea.sflag [#allocation4], 1
    %9 = vsyncpa %s8, 0
    %10 = vsyncpa [#allocation7], 0
    %s11 = scalar_lea.sflag [#allocation7], 1
    %12 = vsyncpa %s11, 0
    %13 = vsyncpa [#allocation5], 0
    %s14 = scalar_lea.sflag [#allocation5], 1
    %15 = vsyncpa %s14, 0
    loop: start=0, step=1, limit=6
    $region2: #{tpu_custom_call.1} parent=1 // loop_pre_header
      _
    $region3: #{tpu_custom_call.1} parent=1 // loop_header
      %s17 = sphi 0, %s21
      %p18 = scmp.ge.s32.totalorder %s17, 6
      %s24 = sphi 0, %s36
      %s25 = sphi 0, %s32
      %s26 = sphi 0, %s24
      %s27 = sphi 0, %s25
      %s28 = sphi 0, %s26
      %s29 = sphi 0, %s27
      %s47 = sphi 0, %s49
      %s50 = sphi 0, %s47
      %s51 = sphi 0, %s50
      %s67 = sphi 0, %s51
      %s81 = sphi 0, %s83
      %s84 = sphi 0, %s81
      %s85 = sphi 0, %s84
      %s101 = sphi 0, %s85
      %s107 = sphi 0, %s109
      %s110 = sphi 0, %s107
      %s111 = sphi 0, %s110
      %s127 = sphi 0, %s111
    $region4: #{tpu_custom_call.1} parent=1 // loop_header_branch
      %20 = sbr.rel (%p18) target = $region8
    $region5: #{tpu_custom_call.1} parent=1 // loop_body
      %s22 = ssub.s32 %s17, 1
      %s23 = ssub.s32 %s17, 2
      %s30 = sadd.s32 1, %s25
      %p31 = scmp.ge.s32.totalorder %s30, 2
      %s32 = scalar_select %p31, 0, %s30
      %s33 = sadd.s32 1, %s24
      %s34 = scalar_select %p31, %s33, %s24
      %p35 = scmp.ge.s32.totalorder %s34, 2
      %s36 = scalar_select %p35, 0, %s34
      %s37 = smul.u32 %s24, 2
      %s38 = sadd.s32 %s37, %s25
      %p39 = scmp.lt.s32.totalorder %s38, 2
      %s40 = scalar_select %p39, %s38, 2
      %s41 = smul.u32 %s36, 2
      %s42 = sadd.s32 %s41, %s32
      %p43 = scmp.lt.s32.totalorder %s42, 2
      %s44 = scalar_select %p43, %s42, 2
      %s45 = ssub.s32 %s40, %s44
      %p46 = scmp.eq.s32.totalorder %s45, 0
      %s48 = sadd.s32 %s47, 1
      %s49 = scalar_select %p46, %s47, %s48
      %p52 = pneg %p46
      %p53 = scmp.eq.s32.totalorder %s17, 3
      %p54 = por %p52, %p53
      %p55 = scmp.ne.s32.totalorder %s47, %s50
      %p56 = scmp.eq.s32.totalorder %s17, 0
      %p57 = por %p55, %p56
      %p58 = scmp.ne.s32.totalorder %s47, %s50
      %p59 = scmp.eq.s32.totalorder %s22, 3
      %p60 = por %p58, %p59
      %p61 = scmp.ne.s32.totalorder %s50, %s51
      %p62 = scmp.eq.s32.totalorder %s22, 0
      %p63 = por %p61, %p62
      %p64 = scmp.ne.s32.totalorder %s50, %s51
      %p65 = scmp.eq.s32.totalorder %s23, 3
      %p66 = por %p64, %p65
      %p68 = scmp.ne.s32.totalorder %s51, %s67
      %p69 = scmp.eq.s32.totalorder %s23, 0
      %p70 = por %p68, %p69
      %s71 = smul.u32 %s24, 2
      %s72 = sadd.s32 %s71, %s25
      %p73 = scmp.lt.s32.totalorder %s72, 2
      %s74 = scalar_select %p73, %s72, 2
      %s75 = smul.u32 %s36, 2
      %s76 = sadd.s32 %s75, %s32
      %p77 = scmp.lt.s32.totalorder %s76, 2
      %s78 = scalar_select %p77, %s76, 2
      %s79 = ssub.s32 %s74, %s78
      %p80 = scmp.eq.s32.totalorder %s79, 0
      %s82 = sadd.s32 %s81, 1
      %s83 = scalar_select %p80, %s81, %s82
      %p86 = pneg %p80
      %p87 = scmp.eq.s32.totalorder %s17, 3
      %p88 = por %p86, %p87
      %p89 = scmp.ne.s32.totalorder %s81, %s84
      %p90 = scmp.eq.s32.totalorder %s17, 0
      %p91 = por %p89, %p90
      %p92 = scmp.ne.s32.totalorder %s81, %s84
      %p93 = scmp.eq.s32.totalorder %s22, 3
      %p94 = por %p92, %p93
      %p95 = scmp.ne.s32.totalorder %s84, %s85
      %p96 = scmp.eq.s32.totalorder %s22, 0
      %p97 = por %p95, %p96
      %p98 = scmp.ne.s32.totalorder %s84, %s85
      %p99 = scmp.eq.s32.totalorder %s23, 3
      %p100 = por %p98, %p99
      %p102 = scmp.ne.s32.totalorder %s85, %s101
      %p103 = scmp.eq.s32.totalorder %s23, 0
      %p104 = por %p102, %p103
      %s105 = ssub.s32 %s24, %s36
      %p106 = scmp.eq.s32.totalorder %s105, 0
      %s108 = sadd.s32 %s107, 1
      %s109 = scalar_select %p106, %s107, %s108
      %p112 = pneg %p106
      %p113 = scmp.eq.s32.totalorder %s17, 3
      %p114 = por %p112, %p113
      %p115 = scmp.ne.s32.totalorder %s107, %s110
      %p116 = scmp.eq.s32.totalorder %s17, 0
      %p117 = por %p115, %p116
      %p118 = scmp.ne.s32.totalorder %s107, %s110
      %p119 = scmp.eq.s32.totalorder %s22, 3
      %p120 = por %p118, %p119
      %p121 = scmp.ne.s32.totalorder %s110, %s111
      %p122 = scmp.eq.s32.totalorder %s22, 0
      %p123 = por %p121, %p122
      %p124 = scmp.ne.s32.totalorder %s110, %s111
      %p125 = scmp.eq.s32.totalorder %s23, 3
      %p126 = por %p124, %p125
      %p128 = scmp.ne.s32.totalorder %s111, %s127
      %p129 = scmp.eq.s32.totalorder %s23, 0
      %p130 = por %p128, %p129
      %p131 = scmp.le.s32.totalorder 1, %s17
      %p132 = scmp.lt.s32.totalorder %s17, 5
      %p133 = pnand %p131, %p132
      %p134 = pneg %p133
      // Predicated region
      $region9: #{tpu_custom_call.1} parent=5 // pred_check
        _
      $region10: #{tpu_custom_call.1} parent=5 // pred_check_branch
        %136 = sbr.rel (%p133) target = $region12
      $region11: #{tpu_custom_call.1} parent=5 // pred_region
        %s137 = ssub.s32 %s17, 1
      $region12: #{tpu_custom_call.1} parent=5 // pred_fallthru
        _
      %p138 = scmp.lt.s32.totalorder %s17, 4
      // Predicated region
      $region13: #{tpu_custom_call.1} parent=5 // pred_check
        %p139 = pneg %p138
      $region14: #{tpu_custom_call.1} parent=5 // pred_check_branch
        %141 = sbr.rel (%p139) target = $region16
      $region15: #{tpu_custom_call.1} parent=5 // pred_region
        // Predicated region
        $region17: #{tpu_custom_call.1} parent=15 // pred_check
          %p142 = pneg %p57
        $region18: #{tpu_custom_call.1} parent=15 // pred_check_branch
          %144 = sbr.rel (%p142) target = $region20
        $region19: #{tpu_custom_call.1} parent=15 // pred_region
          %s145 = sand.u32 %s47, 1
          %s146 = scalar_lea.sflag [#allocation4], %s145
          %s147 = sand.u32 %s47, 1
          %s148 = smul.addr %s147, 8
          %s149 = scalar_lea.vmem [#allocation3], %s148
          %s150 = smul.u32 %s24, 2
          %s151 = sadd.s32 %s150, %s25
          %p152 = scmp.lt.s32.totalorder %s151, 2
          %s153 = scalar_select %p152, %s151, 2
          %s155 = ssub.s32 128, 128
          %156 = vsyncadd %s146, %s155
          %s157 = smul.addr %s153, 128
          %s158 = scalar_lea.hbm %s0, %s157
          %s160 = sshll.u32 %s149, 4
          %s161 = int_to_ptr.vmem [resolvable:$true] %s160
          %163 = dma.hbm_to_vmem [thread:$0]  %s158, 128, %s161, %s146
        $region20: #{tpu_custom_call.1} parent=15 // pred_fallthru
          _
        // Predicated region
        $region21: #{tpu_custom_call.1} parent=15 // pred_check
          %p164 = pneg %p91
        $region22: #{tpu_custom_call.1} parent=15 // pred_check_branch
          %166 = sbr.rel (%p164) target = $region24
        $region23: #{tpu_custom_call.1} parent=15 // pred_region
          %s167 = sand.u32 %s81, 1
          %s168 = scalar_lea.sflag [#allocation7], %s167
          %s169 = sand.u32 %s81, 1
          %s170 = smul.addr %s169, 8
          %s171 = scalar_lea.vmem [#allocation6], %s170
          %s172 = smul.u32 %s24, 2
          %s173 = sadd.s32 %s172, %s25
          %p174 = scmp.lt.s32.totalorder %s173, 2
          %s175 = scalar_select %p174, %s173, 2
          %s177 = ssub.s32 128, 128
          %178 = vsyncadd %s168, %s177
          %s179 = smul.addr %s175, 128
          %s180 = scalar_lea.hbm %s1, %s179
          %s182 = sshll.u32 %s171, 4
          %s183 = int_to_ptr.vmem [resolvable:$true] %s182
          %185 = dma.hbm_to_vmem [thread:$0]  %s180, 128, %s183, %s168
        $region24: #{tpu_custom_call.1} parent=15 // pred_fallthru
          _
      $region16: #{tpu_custom_call.1} parent=5 // pred_fallthru
        _
      %p186 = scmp.le.s32.totalorder 1, %s17
      %p187 = scmp.lt.s32.totalorder %s17, 5
      %p188 = pnand %p186, %p187
      %p189 = pneg %p188
      // Predicated region
      $region25: #{tpu_custom_call.1} parent=5 // pred_check
        _
      $region26: #{tpu_custom_call.1} parent=5 // pred_check_branch
        %191 = sbr.rel (%p188) target = $region28
      $region27: #{tpu_custom_call.1} parent=5 // pred_region
        %s192 = ssub.s32 %s17, 1
        %s193 = sand.u32 %s50, 1
        %s194 = scalar_lea.sflag [#allocation4], %s193
        %s195 = sand.u32 %s50, 1
        %s196 = smul.addr %s195, 8
        %s197 = scalar_lea.vmem [#allocation3], %s196
        // Predicated region
        $region29: #{tpu_custom_call.1} parent=27 // pred_check
          %p198 = pneg %p63
        $region30: #{tpu_custom_call.1} parent=27 // pred_check_branch
          %200 = sbr.rel (%p198) target = $region32
        $region31: #{tpu_custom_call.1} parent=27 // pred_region
          %201 = dma.done %s194, 128
        $region32: #{tpu_custom_call.1} parent=27 // pred_fallthru
          _
        %s202 = sand.u32 %s84, 1
        %s203 = scalar_lea.sflag [#allocation7], %s202
        %s204 = sand.u32 %s84, 1
        %s205 = smul.addr %s204, 8
        %s206 = scalar_lea.vmem [#allocation6], %s205
        // Predicated region
        $region33: #{tpu_custom_call.1} parent=27 // pred_check
          %p207 = pneg %p97
        $region34: #{tpu_custom_call.1} parent=27 // pred_check_branch
          %209 = sbr.rel (%p207) target = $region36
        $region35: #{tpu_custom_call.1} parent=27 // pred_region
          %210 = dma.done %s203, 128
        $region36: #{tpu_custom_call.1} parent=27 // pred_fallthru
          _
        %s211 = sand.u32 %s50, 1
        %s212 = scalar_lea.sflag [#allocation4], %s211
        %s213 = sand.u32 %s50, 1
        %s214 = smul.addr %s213, 8
        %s215 = scalar_lea.vmem [#allocation3], %s214
        %p216 = pneg %p63
        %p217 = pneg %p60
        %s218 = sand.u32 %s84, 1
        %s219 = scalar_lea.sflag [#allocation7], %s218
        %s220 = sand.u32 %s84, 1
        %s221 = smul.addr %s220, 8
        %s222 = scalar_lea.vmem [#allocation6], %s221
        %p223 = pneg %p97
        %p224 = pneg %p94
        %p225 = pneg %p123
        %p226 = pneg %p120
        %s227 = sand.u32 %s110, 1
        %s228 = scalar_lea.sflag [#allocation5], %s227
        %s229 = sand.u32 %s110, 1
        %s230 = smul.addr %s229, 8
        %s231 = scalar_lea.vmem [#allocation8], %s230
        %s232 = smul.u32 %s26, 2
        %s233 = sadd.s32 %s232, %s27
        %p234 = scmp.lt.s32.totalorder %s233, 2
        %s235 = scalar_select %p234, %s233, 2
        %s236 = smul.u32 %s26, 2
        %s237 = sadd.s32 %s236, %s27
        %p238 = scmp.lt.s32.totalorder %s237, 2
        %s239 = scalar_select %p238, %s237, 2
        %p240 = scmp.eq.s32.totalorder %s27, 0
        // Predicated region
        $region37: #{tpu_custom_call.1} parent=27 // pred_check
          %p241 = pneg %p240
        $region38: #{tpu_custom_call.1} parent=27 // pred_check_branch
          %243 = sbr.rel (%p241) target = $region40
        $region39: #{tpu_custom_call.1} parent=27 // pred_region
          %vm244 = vcmask 0
          %245 = vst.msk [vmem:[#allocation2] sm:$0x1] %vm244, 0.0
        $region40: #{tpu_custom_call.1} parent=27 // pred_fallthru
          _
        %v246 = vld [vmem:[%s197] sm:$0xff]
        %v247 = vmul.f32 %v246, 0.25
        %v248 = vld [vmem:[%s206] sm:$0xff]
        %v249 = vmul.f32 %v248, 0.25
        %250 = vmax.xlane.f32.xlu0 %v247
        %v251 = vpop.xlane.xlu0 %250
        %v252 = vsub.f32 %v247, %v251
        %v253 = vmul.f32 %v252, 1.442695
        %v254 = vpow.pop %v253
        %255 = vadd.xlane.f32.xlu0 %v254
        %v256 = vpop.xlane.xlu0 %255
        %v257 = vlog2.pop %v256
        %v258 = vmul.f32 %v257, 0.6931472
        %259 = vmax.xlane.f32.xlu0 %v249
        %v260 = vpop.xlane.xlu0 %259
        %v261 = vsub.f32 %v249, %v260
        %v262 = vmul.f32 %v261, 1.442695
        %v263 = vpow.pop %v262
        %264 = vadd.xlane.f32.xlu0 %v263
        %v265 = vpop.xlane.xlu0 %264
        %v266 = vsub.f32 %v261, %v252
        %v267 = vmul.f32 %v263, %v266
        %268 = vadd.xlane.f32.xlu0 %v267
        %v269 = vpop.xlane.xlu0 %268
        %v270 = vrcp.pop %v265
        %v271 = vmul.f32 %v269, %v270
        %v272 = vlog2.pop %v265
        %v273 = vmul.f32 %v272, 0.6931472
        %v274 = vsub.f32 %v258, %v273
        %v275 = vadd.f32 %v271, %v274
        %s276 = smul.u32 %s26, 2
        %s277 = sadd.s32 %s276, %s27
        %s278 = smul.u32 %s277, 8
        %v279 = vlaneseq
        %v280 = vshrl.u32 %v279, 7
        %v281 = vstv %s278
        %v282 = vadd.s32 %v281, %v280
        %vm283 = vcmp.lt.s32.totalorder %v282, 20
        %v284 = vsel %vm283, %v275, 0.0
        %v285 = vld [vmem:[#allocation2] sm:$0x1]
        %vm286 = vcmask 7168
        %v287 = vsel %vm286, %v284, 0.0
        %288 = vadd.xlane.f32.xlu0 %v287
        %v289 = vpop.xlane.xlu0 %288
        %v290 = vrot.slane %v289, 4
        %v291 = vadd.f32 %v289, %v290
        %v292 = vrot.slane %v291, 2
        %v293 = vadd.f32 %v291, %v292
        %v294 = vrot.slane %v293, 1
        %v295 = vadd.f32 %v293, %v294
        %s296 = vtos %v295
        %v297 = vstv %s296
        %v298 = vadd.f32 %v285, %v297
        %vm299 = vcmask 0
        %300 = vst.msk [vmem:[#allocation2] sm:$0x1] %vm299, %v298
        %p301 = scmp.eq.s32.totalorder %s27, 1
        // Predicated region
        $region41: #{tpu_custom_call.1} parent=27 // pred_check
          %p302 = pneg %p301
        $region42: #{tpu_custom_call.1} parent=27 // pred_check_branch
          %304 = sbr.rel (%p302) target = $region44
        $region43: #{tpu_custom_call.1} parent=27 // pred_region
          %v305 = vld [vmem:[#allocation2] sm:$0x1]
          %v307 = vlaneseq
          %v308 = vshrl.u32 %v307, 7
          %v309 = vsub.s32 0, %v308
          %v310 = vrot.slane %v305, %v309
          %311 = vset.pattern.permute.xlu0 0
          %312 = vperm.xlu0 %311, %v310
          %v313 = vpop.permute.xlu0 %312
          %315 = vst [vmem:[%s231] sm:$0xff] %v313
        $region44: #{tpu_custom_call.1} parent=27 // pred_fallthru
          _
        %s316 = sand.u32 %s110, 1
        %s317 = scalar_lea.sflag [#allocation5], %s316
        %s318 = sand.u32 %s110, 1
        %s319 = smul.addr %s318, 8
        %s320 = scalar_lea.vmem [#allocation8], %s319
        // Predicated region
        $region45: #{tpu_custom_call.1} parent=27 // pred_check
          %p321 = pneg %p120
        $region46: #{tpu_custom_call.1} parent=27 // pred_check_branch
          %323 = sbr.rel (%p321) target = $region48
        $region47: #{tpu_custom_call.1} parent=27 // pred_region
          %s325 = ssub.s32 128, 128
          %326 = vsyncadd %s317, %s325
          %s327 = smul.addr %s26, 128
          %s328 = scalar_lea.hbm %s2, %s327
          %s330 = sshll.u32 %s320, 4
          %s331 = int_to_ptr.vmem [resolvable:$true] %s330
          %333 = dma.vmem_to_hbm [thread:$0]  %s331, 128, %s328, %s317
        $region48: #{tpu_custom_call.1} parent=27 // pred_fallthru
          _
      $region28: #{tpu_custom_call.1} parent=5 // pred_fallthru
        _
      %p334 = scmp.le.s32.totalorder 2, %s17
      // Predicated region
      $region49: #{tpu_custom_call.1} parent=5 // pred_check
        %p335 = pneg %p334
      $region50: #{tpu_custom_call.1} parent=5 // pred_check_branch
        %337 = sbr.rel (%p335) target = $region52
      $region51: #{tpu_custom_call.1} parent=5 // pred_region
        %s338 = ssub.s32 %s17, 2
        // Predicated region
        $region53: #{tpu_custom_call.1} parent=51 // pred_check
          %p339 = pneg %p126
        $region54: #{tpu_custom_call.1} parent=51 // pred_check_branch
          %341 = sbr.rel (%p339) target = $region56
        $region55: #{tpu_custom_call.1} parent=51 // pred_region
          %s342 = sand.u32 %s111, 1
          %s343 = scalar_lea.sflag [#allocation5], %s342
          %s344 = sand.u32 %s111, 1
          %s345 = smul.addr %s344, 8
          %s346 = scalar_lea.vmem [#allocation8], %s345
          %347 = dma.done %s343, 128
        $region56: #{tpu_custom_call.1} parent=51 // pred_fallthru
          _
      $region52: #{tpu_custom_call.1} parent=5 // pred_fallthru
        _
    $region6: #{tpu_custom_call.1} parent=1 // loop_footer
      %s21 = sadd.s32 1, %s17
    $region7: #{tpu_custom_call.1} parent=1 // loop_footer_branch
      %16 = sbr.rel target = $region3
    $region8: #{tpu_custom_call.1} parent=1 // loop_exit
      _
    %348 = vsyncpa [#allocation4], 1
    %s349 = scalar_lea.sflag [#allocation4], 1
    %350 = vsyncpa %s349, 1
    %351 = vsyncpa [#allocation7], 1
    %s352 = scalar_lea.sflag [#allocation7], 1
    %353 = vsyncpa %s352, 1
    %354 = vsyncpa [#allocation5], 1
    %s355 = scalar_lea.sflag [#allocation5], 1
    %356 = vsyncpa %s355, 1

</llo_original>
